<compile_context>
chip_gen: v5e
topology: v5e:2x2
jax: 0.10.0
libtpu: 0.0.40
codegen_flags: <defaults>
</compile_context>

<pallas_src>
import jax
import jax.numpy as jnp
from jax import lax
from jax.experimental import pallas as pl
from jax.experimental.pallas import tpu as pltpu

# Contract the last dim of both operands: (n_out, n_in) x (TB, n_in) -> (n_out, TB)
_NT_DIMS = (((1,), (1,)), ((), ()))


def xor_mlp_kernel(x_ref, w1_ref, b1_ref, w2_ref, b2_ref, o_ref):
    # x_ref : (TB, n)  batch tile, features on lanes (natural PyTorch layout)
    # w1_ref: (n, n)   PyTorch orientation (out_features, in_features)
    # b1_ref: (n, 1)   hidden bias as a column
    # w2_ref: (n, 1)   second-layer weight as a column
    # b2_ref: (1, 1)
    # o_ref : (1, TB)  lane-dense output slab for this batch tile
    ht = lax.dot_general(
        w1_ref[...], x_ref[...], _NT_DIMS,
        preferred_element_type=jnp.float32)            # (n, TB) on the MXU
    ht = jnp.maximum(ht + b1_ref[...], 0.0)            # bias + ReLU (VPU)
    # Second Linear (n -> 1): broadcast-multiply + sublane reduce, no MXU pass.
    y = jnp.sum(ht * w2_ref[...], axis=0, keepdims=True) + b2_ref[...]  # (1, TB)
    o_ref[...] = y.astype(o_ref.dtype)


def xor_model_forward(x, w1, b1, w2, b2, *, block_b=256):
    """Forward pass of XORModel.

    x : (B, n) f32; w1: (n, n) f32 (out,in); b1: (n,); w2: (1, n); b2: (1,).
    Returns (B, 1) f32.
    """
    B, n = x.shape
    tb = max(128, (block_b // 128) * 128)   # lane-dense output tile => multiple of 128
    b_pad = pl.cdiv(B, tb) * tb
    if b_pad != B:
        x = jnp.pad(x, ((0, b_pad - B), (0, 0)))
    grid = (b_pad // tb,)

    b1_col = b1.reshape(n, 1)
    w2_col = w2.reshape(n, 1)
    b2_2d = b2.reshape(1, 1)

    out = pl.pallas_call(
        xor_mlp_kernel,
        out_shape=jax.ShapeDtypeStruct((1, b_pad), x.dtype),
        grid=grid,
        in_specs=[
            pl.BlockSpec((tb, n), lambda i: (i, 0)),   # x tile (streams, double-buffered)
            pl.BlockSpec((n, n), lambda i: (0, 0)),    # W1 (VMEM-resident)
            pl.BlockSpec((n, 1), lambda i: (0, 0)),    # b1
            pl.BlockSpec((n, 1), lambda i: (0, 0)),    # w2
            pl.BlockSpec((1, 1), lambda i: (0, 0)),    # b2
        ],
        out_specs=pl.BlockSpec((1, tb), lambda i: (0, i)),
        compiler_params=pltpu.CompilerParams(
            dimension_semantics=("parallel",),         # shard batch grid on v7x's 2 TCs
        ),
    )(x, w1, b1_col, w2_col, b2_2d)

    return out[0, :B].reshape(B, 1)


def init_params(key, n):
    """Deterministic init mimicking nn.Linear (uniform +/- 1/sqrt(fan_in)),
    stored in PyTorch's native (out_features, in_features) orientation."""
    k1, k2, k3, k4 = jax.random.split(key, 4)
    bound = float(n) ** -0.5
    w1 = jax.random.uniform(k1, (n, n), jnp.float32, -bound, bound)   # (out, in)
    b1 = jax.random.uniform(k2, (n,), jnp.float32, -bound, bound)
    w2 = jax.random.uniform(k3, (1, n), jnp.float32, -bound, bound)   # (out, in)
    b2 = jax.random.uniform(k4, (1,), jnp.float32, -bound, bound)
    return w1, b1, w2, b2


def reference_forward(x, w1, b1, w2, b2):
    h = jnp.maximum(x @ w1.T + b1, 0.0)
    return h @ w2.T + b2


if __name__ == "__main__":
    key = jax.random.PRNGKey(0)
    kx, kp = jax.random.split(key)

    batch, n = 600, 32                       # dataset.args.n = 32; B exercises grid + padding
    x = jax.random.uniform(kx, (batch, n), jnp.float32, -1.0, 1.0)
    w1, b1, w2, b2 = init_params(kp, n)

    out = xor_model_forward(x, w1, b1, w2, b2, block_b=256)
    out = jax.block_until_ready(out)

    ref = reference_forward(x, w1, b1, w2, b2)
    assert out.shape == (batch, 1)
    assert jnp.allclose(out, ref, atol=1e-4, rtol=1e-4), float(jnp.max(jnp.abs(out - ref)))

    print("KERNEL_OK")
</pallas_src>

<mosaic_0001>
module attributes {stable_mosaic.version = 11 : i64} {
  func.func @xor_mlp_kernel(%arg0: i32, %arg1: memref<256x32xf32, #tpu.memory_space<vmem>>, %arg2: memref<32x32xf32, #tpu.memory_space<vmem>>, %arg3: memref<32x1xf32, #tpu.memory_space<vmem>>, %arg4: memref<32x1xf32, #tpu.memory_space<vmem>>, %arg5: memref<1x1xf32, #tpu.memory_space<vmem>>, %arg6: memref<1x256xf32, #tpu.memory_space<vmem>>) attributes {dimension_semantics = [#tpu.dimension_semantics<parallel>], iteration_bounds = array<i64: 3>, scalar_prefetch = 0 : i64, scratch_operands = 0 : i64, tpu.core_type = #tpu.core_type<tc>, window_params = [{transform_indices = @transform_0, window_bounds = array<i64: 256, 32>}, {pipeline_mode = #tpu.pipeline_mode<synchronous>, transform_indices = @transform_1, window_bounds = array<i64: 32, 32>}, {pipeline_mode = #tpu.pipeline_mode<synchronous>, transform_indices = @transform_2, window_bounds = array<i64: 32, 1>}, {pipeline_mode = #tpu.pipeline_mode<synchronous>, transform_indices = @transform_3, window_bounds = array<i64: 32, 1>}, {pipeline_mode = #tpu.pipeline_mode<synchronous>, transform_indices = @transform_4, window_bounds = array<i64: 1, 1>}, {transform_indices = @transform_5, window_bounds = array<i64: 1, 256>}]} {
    %c0 = arith.constant 0 : index
    %c0_0 = arith.constant 0 : index
    %0 = vector.load %arg2[%c0, %c0_0] : memref<32x32xf32, #tpu.memory_space<vmem>>, vector<32x32xf32>
    %c0_1 = arith.constant 0 : index
    %c0_2 = arith.constant 0 : index
    %1 = vector.load %arg1[%c0_1, %c0_2] : memref<256x32xf32, #tpu.memory_space<vmem>>, vector<256x32xf32>
    %cst = arith.constant dense<0.000000e+00> : vector<32x256xf32>
    %2 = tpu.matmul %0, %1, %cst {dimension_numbers = #tpu.dot_dimension_numbers<[1], [1], [0], [0], [0, 0, 1, 0], [], []>} : vector<32x32xf32>, vector<256x32xf32>, vector<32x256xf32> -> vector<32x256xf32>
    %c0_3 = arith.constant 0 : index
    %c0_4 = arith.constant 0 : index
    %3 = vector.load %arg3[%c0_3, %c0_4] : memref<32x1xf32, #tpu.memory_space<vmem>>, vector<32x1xf32>
    %4 = vector.broadcast %3 : vector<32x1xf32> to vector<32x256xf32>
    %5 = arith.addf %2, %4 : vector<32x256xf32>
    %cst_5 = arith.constant 0.000000e+00 : f32
    %6 = vector.broadcast %cst_5 : f32 to vector<32x256xf32>
    %7 = arith.maximumf %5, %6 : vector<32x256xf32>
    %c0_6 = arith.constant 0 : index
    %c0_7 = arith.constant 0 : index
    %8 = vector.load %arg4[%c0_6, %c0_7] : memref<32x1xf32, #tpu.memory_space<vmem>>, vector<32x1xf32>
    %9 = vector.broadcast %8 : vector<32x1xf32> to vector<32x256xf32>
    %10 = arith.mulf %7, %9 : vector<32x256xf32>
    %cst_8 = arith.constant dense<0.000000e+00> : vector<256xf32>
    %11 = vector.multi_reduction <add>, %10, %cst_8 [0] : vector<32x256xf32> to vector<256xf32>
    %12 = vector.shape_cast %11 : vector<256xf32> to vector<1x256xf32>
    %c0_9 = arith.constant 0 : index
    %c0_10 = arith.constant 0 : index
    %13 = vector.load %arg5[%c0_9, %c0_10] : memref<1x1xf32, #tpu.memory_space<vmem>>, vector<1x1xf32>
    %14 = vector.broadcast %13 : vector<1x1xf32> to vector<1x256xf32>
    %15 = arith.addf %12, %14 : vector<1x256xf32>
    %c0_11 = arith.constant 0 : index
    %c0_12 = arith.constant 0 : index
    %16 = vector.load %arg6[%c0_11, %c0_12] : memref<1x256xf32, #tpu.memory_space<vmem>>, vector<1x256xf32>
    tpu.vector_store %arg6[%c0_11, %c0_12], %15 {strides = array<i32>} : memref<1x256xf32, #tpu.memory_space<vmem>>, vector<1x256xf32>,
    return
  }
  func.func @transform_0(%arg0: i32) -> (i32, i32) {
    %c0_i32 = arith.constant 0 : i32
    %c0_i32_0 = arith.constant 0 : i32
    return %arg0, %c0_i32 : i32, i32
  }
  func.func @transform_1(%arg0: i32) -> (i32, i32) {
    %c0_i32 = arith.constant 0 : i32
    %c0_i32_0 = arith.constant 0 : i32
    %c0_i32_1 = arith.constant 0 : i32
    return %c0_i32, %c0_i32_0 : i32, i32
  }
  func.func @transform_2(%arg0: i32) -> (i32, i32) {
    %c0_i32 = arith.constant 0 : i32
    %c0_i32_0 = arith.constant 0 : i32
    %c0_i32_1 = arith.constant 0 : i32
    return %c0_i32, %c0_i32_0 : i32, i32
  }
  func.func @transform_3(%arg0: i32) -> (i32, i32) {
    %c0_i32 = arith.constant 0 : i32
    %c0_i32_0 = arith.constant 0 : i32
    %c0_i32_1 = arith.constant 0 : i32
    return %c0_i32, %c0_i32_0 : i32, i32
  }
  func.func @transform_4(%arg0: i32) -> (i32, i32) {
    %c0_i32 = arith.constant 0 : i32
    %c0_i32_0 = arith.constant 0 : i32
    %c0_i32_1 = arith.constant 0 : i32
    return %c0_i32, %c0_i32_0 : i32, i32
  }
  func.func @transform_5(%arg0: i32) -> (i32, i32) {
    %c0_i32 = arith.constant 0 : i32
    %c0_i32_0 = arith.constant 0 : i32
    return %c0_i32, %arg0 : i32, i32
  }
}

</mosaic_0001>

<llo_original>
// kernel: tpu_custom_call.1
$region0: #{tpu_custom_call.1}
  #allocation0 [shape = 'u32[]', space=smem, size = 0x4, offset = 0x4, fixed_abs, tag = 'smem constant byte address 0x4 - core index']
  #allocation1 [shape = 'u32[72,128]{1,0:T(1,128)}', space=vmem, size = 0x9000, scoped, tag = 'internal scratch']
  #allocation2 [shape = 'f32[1,1]{1,0:T(1,128)S(1)}', space=vmem, size = 0x200, scoped, tag = 'scoped memory for tpu_custom_call.1']
  %s0 = inlined_call_operand.vmem [shape: f32[768,32], index: 0, kind: input, shape index: {}]
  %s1 = inlined_call_operand.vmem [shape: f32[32,32], index: 1, kind: input, shape index: {}]
  %s2 = inlined_call_operand.vmem [shape: f32[32,1], index: 2, kind: input, shape index: {}]
  %s3 = inlined_call_operand.vmem [shape: f32[32,1], index: 3, kind: input, shape index: {}]
  %s4 = inlined_call_operand.<no memory space> [shape: f32[1,1], index: 4, kind: input, shape index: {}]
  %s5 = inlined_call_operand.hbm [shape: f32[1,768], index: 5, kind: output, shape index: {}]
  %s6 = sld [smem:[#allocation0]]
  $region53: #{tpu_custom_call.1} parent=0
    _
  %s8 = ssub.s32 1, %s6
  %s9 = scalar_select 0, %s8, %s6
  %v10 = vstv %s4
  %11 = vst [vmem:[#allocation2] sm:$0x1] %v10
  $region1: #{tpu_custom_call.1} parent=0
    #allocation3 [shape = 'u8[2048]{0}', space=vmem, size = 0x800, scoped, tag = 'output window, operand 0']
    #allocation4 [shape = 's32[2]{0}', space=sflag, size = 0x8, scoped, tag = 'scoped memory for tpu_custom_call.1']
    %12 = vsyncpa [#allocation4], 0
    %s13 = scalar_lea.sflag [#allocation4], 1
    %14 = vsyncpa %s13, 0
    loop: start=0, step=1, limit=5
    $region2: #{tpu_custom_call.1} parent=1 // loop_pre_header
      _
    $region3: #{tpu_custom_call.1} parent=1 // loop_header
      %s16 = sphi 0, %s20
      %p17 = scmp.ge.s32.totalorder %s16, 5
      %s26 = sphi 0, %s28
      %s29 = sphi 0, %s26
      %s30 = sphi 0, %s29
      %s46 = sphi 0, %s30
      %s50 = sphi 0, %s50
      %s52 = sphi 0, %s50
      %s53 = sphi 0, %s52
      %s67 = sphi 0, %s53
      %s71 = sphi 0, %s71
      %s73 = sphi 0, %s71
      %s74 = sphi 0, %s73
      %s88 = sphi 0, %s74
      %s92 = sphi 0, %s92
      %s94 = sphi 0, %s92
      %s95 = sphi 0, %s94
      %s109 = sphi 0, %s95
      %s113 = sphi 0, %s113
      %s115 = sphi 0, %s113
      %s116 = sphi 0, %s115
      %s130 = sphi 0, %s116
      %s136 = sphi 0, %s138
      %s139 = sphi 0, %s136
      %s140 = sphi 0, %s139
      %s156 = sphi 0, %s140
    $region4: #{tpu_custom_call.1} parent=1 // loop_header_branch
      %19 = sbr.rel (%p17) target = $region8
    $region5: #{tpu_custom_call.1} parent=1 // loop_body
      %s21 = ssub.s32 %s16, 1
      %s22 = ssub.s32 %s16, 2
      %s23 = sadd.s32 %s16, 1
      %s24 = ssub.s32 %s16, %s23
      %p25 = scmp.eq.s32.totalorder %s24, 0
      %s27 = sadd.s32 %s26, 1
      %s28 = scalar_select %p25, %s26, %s27
      %p31 = pneg %p25
      %p32 = scmp.eq.s32.totalorder %s16, 2
      %p33 = por %p31, %p32
      %p34 = scmp.ne.s32.totalorder %s26, %s29
      %p35 = scmp.eq.s32.totalorder %s16, 0
      %p36 = por %p34, %p35
      %p37 = scmp.ne.s32.totalorder %s26, %s29
      %p38 = scmp.eq.s32.totalorder %s21, 2
      %p39 = por %p37, %p38
      %p40 = scmp.ne.s32.totalorder %s29, %s30
      %p41 = scmp.eq.s32.totalorder %s21, 0
      %p42 = por %p40, %p41
      %p43 = scmp.ne.s32.totalorder %s29, %s30
      %p44 = scmp.eq.s32.totalorder %s22, 2
      %p45 = por %p43, %p44
      %p47 = scmp.ne.s32.totalorder %s30, %s46
      %p48 = scmp.eq.s32.totalorder %s22, 0
      %p49 = por %p47, %p48
      %s51 = sadd.s32 %s50, 1
      %p54 = scmp.eq.s32.totalorder %s16, 2
      %p55 = scmp.ne.s32.totalorder %s50, %s52
      %p56 = scmp.eq.s32.totalorder %s16, 0
      %p57 = por %p55, %p56
      %p58 = scmp.ne.s32.totalorder %s50, %s52
      %p59 = scmp.eq.s32.totalorder %s21, 2
      %p60 = por %p58, %p59
      %p61 = scmp.ne.s32.totalorder %s52, %s53
      %p62 = scmp.eq.s32.totalorder %s21, 0
      %p63 = por %p61, %p62
      %p64 = scmp.ne.s32.totalorder %s52, %s53
      %p65 = scmp.eq.s32.totalorder %s22, 2
      %p66 = por %p64, %p65
      %p68 = scmp.ne.s32.totalorder %s53, %s67
      %p69 = scmp.eq.s32.totalorder %s22, 0
      %p70 = por %p68, %p69
      %s72 = sadd.s32 %s71, 1
      %p75 = scmp.eq.s32.totalorder %s16, 2
      %p76 = scmp.ne.s32.totalorder %s71, %s73
      %p77 = scmp.eq.s32.totalorder %s16, 0
      %p78 = por %p76, %p77
      %p79 = scmp.ne.s32.totalorder %s71, %s73
      %p80 = scmp.eq.s32.totalorder %s21, 2
      %p81 = por %p79, %p80
      %p82 = scmp.ne.s32.totalorder %s73, %s74
      %p83 = scmp.eq.s32.totalorder %s21, 0
      %p84 = por %p82, %p83
      %p85 = scmp.ne.s32.totalorder %s73, %s74
      %p86 = scmp.eq.s32.totalorder %s22, 2
      %p87 = por %p85, %p86
      %p89 = scmp.ne.s32.totalorder %s74, %s88
      %p90 = scmp.eq.s32.totalorder %s22, 0
      %p91 = por %p89, %p90
      %s93 = sadd.s32 %s92, 1
      %p96 = scmp.eq.s32.totalorder %s16, 2
      %p97 = scmp.ne.s32.totalorder %s92, %s94
      %p98 = scmp.eq.s32.totalorder %s16, 0
      %p99 = por %p97, %p98
      %p100 = scmp.ne.s32.totalorder %s92, %s94
      %p101 = scmp.eq.s32.totalorder %s21, 2
      %p102 = por %p100, %p101
      %p103 = scmp.ne.s32.totalorder %s94, %s95
      %p104 = scmp.eq.s32.totalorder %s21, 0
      %p105 = por %p103, %p104
      %p106 = scmp.ne.s32.totalorder %s94, %s95
      %p107 = scmp.eq.s32.totalorder %s22, 2
      %p108 = por %p106, %p107
      %p110 = scmp.ne.s32.totalorder %s95, %s109
      %p111 = scmp.eq.s32.totalorder %s22, 0
      %p112 = por %p110, %p111
      %s114 = sadd.s32 %s113, 1
      %p117 = scmp.eq.s32.totalorder %s16, 2
      %p118 = scmp.ne.s32.totalorder %s113, %s115
      %p119 = scmp.eq.s32.totalorder %s16, 0
      %p120 = por %p118, %p119
      %p121 = scmp.ne.s32.totalorder %s113, %s115
      %p122 = scmp.eq.s32.totalorder %s21, 2
      %p123 = por %p121, %p122
      %p124 = scmp.ne.s32.totalorder %s115, %s116
      %p125 = scmp.eq.s32.totalorder %s21, 0
      %p126 = por %p124, %p125
      %p127 = scmp.ne.s32.totalorder %s115, %s116
      %p128 = scmp.eq.s32.totalorder %s22, 2
      %p129 = por %p127, %p128
      %p131 = scmp.ne.s32.totalorder %s116, %s130
      %p132 = scmp.eq.s32.totalorder %s22, 0
      %p133 = por %p131, %p132
      %s134 = ssub.s32 %s16, %s23
      %p135 = scmp.eq.s32.totalorder %s134, 0
      %s137 = sadd.s32 %s136, 1
      %s138 = scalar_select %p135, %s136, %s137
      %p141 = pneg %p135
      %p142 = scmp.eq.s32.totalorder %s16, 2
      %p143 = por %p141, %p142
      %p144 = scmp.ne.s32.totalorder %s136, %s139
      %p145 = scmp.eq.s32.totalorder %s16, 0
      %p146 = por %p144, %p145
      %p147 = scmp.ne.s32.totalorder %s136, %s139
      %p148 = scmp.eq.s32.totalorder %s21, 2
      %p149 = por %p147, %p148
      %p150 = scmp.ne.s32.totalorder %s139, %s140
      %p151 = scmp.eq.s32.totalorder %s21, 0
      %p152 = por %p150, %p151
      %p153 = scmp.ne.s32.totalorder %s139, %s140
      %p154 = scmp.eq.s32.totalorder %s22, 2
      %p155 = por %p153, %p154
      %p157 = scmp.ne.s32.totalorder %s140, %s156
      %p158 = scmp.eq.s32.totalorder %s22, 0
      %p159 = por %p157, %p158
      %p160 = scmp.le.s32.totalorder 1, %s16
      %p161 = scmp.lt.s32.totalorder %s16, 4
      %p162 = pnand %p160, %p161
      %p163 = pneg %p162
      // Predicated region
      $region9: #{tpu_custom_call.1} parent=5 // pred_check
        _
      $region10: #{tpu_custom_call.1} parent=5 // pred_check_branch
        %165 = sbr.rel (%p162) target = $region12
      $region11: #{tpu_custom_call.1} parent=5 // pred_region
        %s166 = ssub.s32 %s16, 1
        // Predicated region
        $region13: #{tpu_custom_call.1} parent=11 // pred_check
          %p167 = pneg %p63
        $region14: #{tpu_custom_call.1} parent=11 // pred_check_branch
          %169 = sbr.rel (%p167) target = $region16
        $region15: #{tpu_custom_call.1} parent=11 // pred_region
          _
        $region16: #{tpu_custom_call.1} parent=11 // pred_fallthru
          _
        // Predicated region
        $region17: #{tpu_custom_call.1} parent=11 // pred_check
          %p170 = pneg %p84
        $region18: #{tpu_custom_call.1} parent=11 // pred_check_branch
          %172 = sbr.rel (%p170) target = $region20
        $region19: #{tpu_custom_call.1} parent=11 // pred_region
          _
        $region20: #{tpu_custom_call.1} parent=11 // pred_fallthru
          _
        // Predicated region
        $region21: #{tpu_custom_call.1} parent=11 // pred_check
          %p173 = pneg %p105
        $region22: #{tpu_custom_call.1} parent=11 // pred_check_branch
          %175 = sbr.rel (%p173) target = $region24
        $region23: #{tpu_custom_call.1} parent=11 // pred_region
          _
        $region24: #{tpu_custom_call.1} parent=11 // pred_fallthru
          _
        // Predicated region
        $region25: #{tpu_custom_call.1} parent=11 // pred_check
          %p176 = pneg %p126
        $region26: #{tpu_custom_call.1} parent=11 // pred_check_branch
          %178 = sbr.rel (%p176) target = $region28
        $region27: #{tpu_custom_call.1} parent=11 // pred_region
          _
        $region28: #{tpu_custom_call.1} parent=11 // pred_fallthru
          _
      $region12: #{tpu_custom_call.1} parent=5 // pred_fallthru
        _
      %p179 = scmp.lt.s32.totalorder %s16, 3
      // Predicated region
      $region29: #{tpu_custom_call.1} parent=5 // pred_check
        %p180 = pneg %p179
      $region30: #{tpu_custom_call.1} parent=5 // pred_check_branch
        %182 = sbr.rel (%p180) target = $region32
      $region31: #{tpu_custom_call.1} parent=5 // pred_region
        // Predicated region
        $region33: #{tpu_custom_call.1} parent=31 // pred_check
          %p183 = pneg %p36
        $region34: #{tpu_custom_call.1} parent=31 // pred_check_branch
          %185 = sbr.rel (%p183) target = $region36
        $region35: #{tpu_custom_call.1} parent=31 // pred_region
          %s186 = smul.u32 32, %s16
          %p187 = scmp.lt.s32.totalorder %s186, 95
          %s188 = scalar_select %p187, %s186, 95
          %s189 = smul.addr %s188, 8
          %s190 = scalar_lea.vmem %s0, %s189
          %s191 = smul.u32 32, %s16
        $region36: #{tpu_custom_call.1} parent=31 // pred_fallthru
          _
      $region32: #{tpu_custom_call.1} parent=5 // pred_fallthru
        _
      %p192 = scmp.le.s32.totalorder 1, %s16
      %p193 = scmp.lt.s32.totalorder %s16, 4
      %p194 = pnand %p192, %p193
      %p195 = pneg %p194
      // Predicated region
      $region37: #{tpu_custom_call.1} parent=5 // pred_check
        _
      $region38: #{tpu_custom_call.1} parent=5 // pred_check_branch
        %197 = sbr.rel (%p194) target = $region40
      $region39: #{tpu_custom_call.1} parent=5 // pred_region
        %s198 = ssub.s32 %s16, 1
        %s199 = smul.u32 32, %s21
        %p200 = scmp.lt.s32.totalorder %s199, 95
        %s201 = scalar_select %p200, %s199, 95
        %s202 = smul.addr %s201, 8
        %s203 = scalar_lea.vmem %s0, %s202
        %p204 = pneg %p42
        %p205 = pneg %p39
        %p206 = pneg %p63
        %p207 = pneg %p60
        %p208 = pneg %p84
        %p209 = pneg %p81
        %p210 = pneg %p105
        %p211 = pneg %p102
        %p212 = pneg %p126
        %p213 = pneg %p123
        %p214 = pneg %p152
        %p215 = pneg %p149
        %s216 = sand.u32 %s139, 1
        %s217 = scalar_lea.sflag [#allocation4], %s216
        %s218 = sand.u32 %s139, 1
        %s219 = smul.addr %s218, 2
        %s220 = scalar_lea.vmem [#allocation3], %s219
        %s221 = smul.u32 32, %s21
        %p222 = scmp.lt.s32.totalorder %s221, 95
        %s223 = scalar_select %p222, %s221, 95
        %s224 = smul.addr %s223, 8
        %s225 = scalar_lea.vmem %s0, %s224
        %s226 = smul.u32 32, %s21
        %s227 = smul.u32 2, %s21
        %v228 = vld [vmem:[%s1] sm:$0xff]
        %v229 = vld [vmem:[%s1 + $0x8] sm:$0xff]
        %v230 = vld [vmem:[%s1 + $0x10] sm:$0xff]
        %v231 = vld [vmem:[%s1 + $0x18] sm:$0xff]
        %v232 = vld [vmem:[%s225] sm:$0xff]
        %v233 = vld [vmem:[%s225 + $0x8] sm:$0xff]
        %v234 = vld [vmem:[%s225 + $0x10] sm:$0xff]
        %v235 = vld [vmem:[%s225 + $0x18] sm:$0xff]
        %v236 = vld [vmem:[%s225 + $0x20] sm:$0xff]
        %v237 = vld [vmem:[%s225 + $0x28] sm:$0xff]
        %v238 = vld [vmem:[%s225 + $0x30] sm:$0xff]
        %v239 = vld [vmem:[%s225 + $0x38] sm:$0xff]
        %v240 = vld [vmem:[%s225 + $0x40] sm:$0xff]
        %v241 = vld [vmem:[%s225 + $0x48] sm:$0xff]
        %v242 = vld [vmem:[%s225 + $0x50] sm:$0xff]
        %v243 = vld [vmem:[%s225 + $0x58] sm:$0xff]
        %v244 = vld [vmem:[%s225 + $0x60] sm:$0xff]
        %v245 = vld [vmem:[%s225 + $0x68] sm:$0xff]
        %v246 = vld [vmem:[%s225 + $0x70] sm:$0xff]
        %v247 = vld [vmem:[%s225 + $0x78] sm:$0xff]
        %v248 = vld [vmem:[%s225 + $0x80] sm:$0xff]
        %v249 = vld [vmem:[%s225 + $0x88] sm:$0xff]
        %v250 = vld [vmem:[%s225 + $0x90] sm:$0xff]
        %v251 = vld [vmem:[%s225 + $0x98] sm:$0xff]
        %v252 = vld [vmem:[%s225 + $0xa0] sm:$0xff]
        %v253 = vld [vmem:[%s225 + $0xa8] sm:$0xff]
        %v254 = vld [vmem:[%s225 + $0xb0] sm:$0xff]
        %v255 = vld [vmem:[%s225 + $0xb8] sm:$0xff]
        %v256 = vld [vmem:[%s225 + $0xc0] sm:$0xff]
        %v257 = vld [vmem:[%s225 + $0xc8] sm:$0xff]
        %v258 = vld [vmem:[%s225 + $0xd0] sm:$0xff]
        %v259 = vld [vmem:[%s225 + $0xd8] sm:$0xff]
        %v260 = vld [vmem:[%s225 + $0xe0] sm:$0xff]
        %v261 = vld [vmem:[%s225 + $0xe8] sm:$0xff]
        %v262 = vld [vmem:[%s225 + $0xf0] sm:$0xff]
        %v263 = vld [vmem:[%s225 + $0xf8] sm:$0xff]
        %v264 = vld [vmem:[%s2] sm:$0xff]
        %v265 = vld [vmem:[%s2 + $0x8] sm:$0xff]
        %v266 = vld [vmem:[%s2 + $0x10] sm:$0xff]
        %v267 = vld [vmem:[%s2 + $0x18] sm:$0xff]
        %269 = vset.pattern.permute.xlu0 0
        %270 = vperm.xlu0 %269, %v264
        %v271 = vpop.permute.xlu0 %270
        %274 = vset.pattern.permute.xlu0 0
        %275 = vperm.xlu0 %274, %v265
        %v276 = vpop.permute.xlu0 %275
        %279 = vset.pattern.permute.xlu0 0
        %280 = vperm.xlu0 %279, %v266
        %v281 = vpop.permute.xlu0 %280
        %284 = vset.pattern.permute.xlu0 0
        %285 = vperm.xlu0 %284, %v267
        %v286 = vpop.permute.xlu0 %285
        %vm288 = vcmask 261120
        %v290 = vsel %vm288, %v228, 0
        %v293 = vsel %vm288, %v229, 0
        %v296 = vsel %vm288, %v230, 0
        %v299 = vsel %vm288, %v231, 0
        %v302 = vsel %vm288, %v232, 0
        %v305 = vsel %vm288, %v233, 0
        %v308 = vsel %vm288, %v234, 0
        %v311 = vsel %vm288, %v235, 0
        %v314 = vsel %vm288, %v236, 0
        %v317 = vsel %vm288, %v237, 0
        %v320 = vsel %vm288, %v238, 0
        %v323 = vsel %vm288, %v239, 0
        %v326 = vsel %vm288, %v240, 0
        %v329 = vsel %vm288, %v241, 0
        %v332 = vsel %vm288, %v242, 0
        %v335 = vsel %vm288, %v243, 0
        %v338 = vsel %vm288, %v244, 0
        %v341 = vsel %vm288, %v245, 0
        %v344 = vsel %vm288, %v246, 0
        %v347 = vsel %vm288, %v247, 0
        %v350 = vsel %vm288, %v248, 0
        %v353 = vsel %vm288, %v249, 0
        %v356 = vsel %vm288, %v250, 0
        %v359 = vsel %vm288, %v251, 0
        %v362 = vsel %vm288, %v252, 0
        %v365 = vsel %vm288, %v253, 0
        %v368 = vsel %vm288, %v254, 0
        %v371 = vsel %vm288, %v255, 0
        %v374 = vsel %vm288, %v256, 0
        %v377 = vsel %vm288, %v257, 0
        %v380 = vsel %vm288, %v258, 0
        %v383 = vsel %vm288, %v259, 0
        %v386 = vsel %vm288, %v260, 0
        %v389 = vsel %vm288, %v261, 0
        %v392 = vsel %vm288, %v262, 0
        %v395 = vsel %vm288, %v263, 0
        %397 = vmatpush.xpose.msra.mxu0 %v347
        %398 = vmatpush.xpose.msra.mxu0 %v344
        %399 = vmatpush.xpose.msra.mxu0 %v341
        %400 = vmatpush.xpose.msra.mxu0 %v338
        %401 = vmatpush.xpose.msra.mxu0 %v335
        %402 = vmatpush.xpose.msra.mxu0 %v332
        %403 = vmatpush.xpose.msra.mxu0 %v329
        %404 = vmatpush.xpose.msra.mxu0 %v326
        %405 = vmatpush.xpose.msra.mxu0 %v323
        %406 = vmatpush.xpose.msra.mxu0 %v320
        %407 = vmatpush.xpose.msra.mxu0 %v317
        %408 = vmatpush.xpose.msra.mxu0 %v314
        %409 = vmatpush.xpose.msra.mxu0 %v311
        %410 = vmatpush.xpose.msra.mxu0 %v308
        %411 = vmatpush.xpose.msra.mxu0 %v305
        %412 = vmatpush.xpose.msra.mxu0 %v302
        %413 = vmatmul.f32.gmra.mxu0 %v290
        %v414 = vpop.f32.mrf.mxu0
        %v415 = vadd.f32 %v271, %v414
        %416 = vmatmul.f32.gmra.mxu0 %v293
        %v417 = vpop.f32.mrf.mxu0
        %v418 = vadd.f32 %v276, %v417
        %419 = vmatmul.f32.gmra.mxu0 %v296
        %v420 = vpop.f32.mrf.mxu0
        %v421 = vadd.f32 %v281, %v420
        %422 = vmatmul.f32.gmra.mxu0 %v299
        %v423 = vpop.f32.mrf.mxu0
        %v424 = vadd.f32 %v286, %v423
        %425 = vdwg.mxu0
        %426 = vmatpush.xpose.msra.mxu0 %v395
        %427 = vmatpush.xpose.msra.mxu0 %v392
        %428 = vmatpush.xpose.msra.mxu0 %v389
        %429 = vmatpush.xpose.msra.mxu0 %v386
        %430 = vmatpush.xpose.msra.mxu0 %v383
        %431 = vmatpush.xpose.msra.mxu0 %v380
        %432 = vmatpush.xpose.msra.mxu0 %v377
        %433 = vmatpush.xpose.msra.mxu0 %v374
        %434 = vmatpush.xpose.msra.mxu0 %v371
        %435 = vmatpush.xpose.msra.mxu0 %v368
        %436 = vmatpush.xpose.msra.mxu0 %v365
        %437 = vmatpush.xpose.msra.mxu0 %v362
        %438 = vmatpush.xpose.msra.mxu0 %v359
        %439 = vmatpush.xpose.msra.mxu0 %v356
        %440 = vmatpush.xpose.msra.mxu0 %v353
        %441 = vmatpush.xpose.msra.mxu0 %v350
        %442 = vmatmul.f32.gmra.mxu0 %v290
        %v443 = vpop.f32.mrf.mxu0
        %v444 = vadd.f32 %v271, %v443
        %445 = vmatmul.f32.gmra.mxu0 %v293
        %v446 = vpop.f32.mrf.mxu0
        %v447 = vadd.f32 %v276, %v446
        %448 = vmatmul.f32.gmra.mxu0 %v296
        %v449 = vpop.f32.mrf.mxu0
        %v450 = vadd.f32 %v281, %v449
        %451 = vmatmul.f32.gmra.mxu0 %v299
        %v452 = vpop.f32.mrf.mxu0
        %v453 = vadd.f32 %v286, %v452
        %454 = vdwg.mxu0
        %v455 = vmax.f32 %v415, 0.0
        %v456 = vmax.f32 %v444, 0.0
        %v457 = vmax.f32 %v418, 0.0
        %v458 = vmax.f32 %v447, 0.0
        %v459 = vmax.f32 %v421, 0.0
        %v460 = vmax.f32 %v450, 0.0
        %v461 = vmax.f32 %v424, 0.0
        %v462 = vmax.f32 %v453, 0.0
        %v463 = vld [vmem:[%s3] sm:$0xff]
        %v464 = vld [vmem:[%s3 + $0x8] sm:$0xff]
        %v465 = vld [vmem:[%s3 + $0x10] sm:$0xff]
        %v466 = vld [vmem:[%s3 + $0x18] sm:$0xff]
        %468 = vset.pattern.permute.xlu0 0
        %469 = vperm.xlu0 %468, %v463
        %v470 = vpop.permute.xlu0 %469
        %473 = vset.pattern.permute.xlu0 0
        %474 = vperm.xlu0 %473, %v464
        %v475 = vpop.permute.xlu0 %474
        %478 = vset.pattern.permute.xlu0 0
        %479 = vperm.xlu0 %478, %v465
        %v480 = vpop.permute.xlu0 %479
        %483 = vset.pattern.permute.xlu0 0
        %484 = vperm.xlu0 %483, %v466
        %v485 = vpop.permute.xlu0 %484
        %v487 = vmul.f32 %v455, %v470
        %v488 = vmul.f32 %v456, %v470
        %v489 = vmul.f32 %v457, %v475
        %v490 = vmul.f32 %v458, %v475
        %v491 = vmul.f32 %v459, %v480
        %v492 = vmul.f32 %v460, %v480
        %v493 = vmul.f32 %v461, %v485
        %v494 = vmul.f32 %v462, %v485
        %v495 = vadd.f32 %v487, %v489
        %v496 = vadd.f32 %v495, %v491
        %v497 = vadd.f32 %v496, %v493
        %v498 = vrot.slane %v497, 4
        %v499 = vadd.f32 %v497, %v498
        %v500 = vrot.slane %v499, 2
        %v501 = vadd.f32 %v499, %v500
        %v502 = vrot.slane %v501, 1
        %v503 = vadd.f32 %v501, %v502
        %v504 = vadd.f32 %v488, %v490
        %v505 = vadd.f32 %v504, %v492
        %v506 = vadd.f32 %v505, %v494
        %v507 = vrot.slane %v506, 4
        %v508 = vadd.f32 %v506, %v507
        %v509 = vrot.slane %v508, 2
        %v510 = vadd.f32 %v508, %v509
        %v511 = vrot.slane %v510, 1
        %v512 = vadd.f32 %v510, %v511
        %v513 = vld [vmem:[#allocation2] sm:$0x1]
        %515 = vset.pattern.permute.xlu0 0
        %516 = vperm.xlu0 %515, %v513
        %v517 = vpop.permute.xlu0 %516
        %v519 = vperm.slane %v517, 0
        %v520 = vadd.f32 %v503, %v519
        %v521 = vadd.f32 %v512, %v519
        %v524 = vrot.slane %v521, 7
        %vm525 = vcmask 1040384
        %v526 = vsel %vm525, %v520, %v524
        %v528 = vlaneseq
        %vm529 = vcmp.ge.s32.totalorder %v528, 0
        %vm530 = vcmp.lt.s32.totalorder %v528, 256
        %vm531 = vmand %vm529, %vm530
        %532 = vst.msk [vmem:[%s220] sm:$0x3] %vm531, %v526
        %s533 = sand.u32 %s139, 1
        %s534 = scalar_lea.sflag [#allocation4], %s533
        %s535 = sand.u32 %s139, 1
        %s536 = smul.addr %s535, 2
        %s537 = scalar_lea.vmem [#allocation3], %s536
        // Predicated region
        $region41: #{tpu_custom_call.1} parent=39 // pred_check
          %p538 = pneg %p149
        $region42: #{tpu_custom_call.1} parent=39 // pred_check_branch
          %540 = sbr.rel (%p538) target = $region44
        $region43: #{tpu_custom_call.1} parent=39 // pred_region
          %s541 = smul.u32 2, %s21
          %543 = vsyncadd %s534, 0
          %s544 = scalar_lea.hbm %s5, %s541
          %s546 = sshll.u32 %s537, 4
          %s547 = int_to_ptr.vmem [resolvable:$true] %s546
          %s548 = sshll.u32 %s544, 4
          %s549 = int_to_ptr.hbm [resolvable:$true] %s548
          %551 = dma.vmem_to_hbm [thread:$0]  %s547, 32, %s549, %s534
        $region44: #{tpu_custom_call.1} parent=39 // pred_fallthru
          _
      $region40: #{tpu_custom_call.1} parent=5 // pred_fallthru
        _
      %p552 = scmp.le.s32.totalorder 2, %s16
      // Predicated region
      $region45: #{tpu_custom_call.1} parent=5 // pred_check
        %p553 = pneg %p552
      $region46: #{tpu_custom_call.1} parent=5 // pred_check_branch
        %555 = sbr.rel (%p553) target = $region48
      $region47: #{tpu_custom_call.1} parent=5 // pred_region
        %s556 = ssub.s32 %s16, 2
        // Predicated region
        $region49: #{tpu_custom_call.1} parent=47 // pred_check
          %p557 = pneg %p155
        $region50: #{tpu_custom_call.1} parent=47 // pred_check_branch
          %559 = sbr.rel (%p557) target = $region52
        $region51: #{tpu_custom_call.1} parent=47 // pred_region
          %s560 = sand.u32 %s140, 1
          %s561 = scalar_lea.sflag [#allocation4], %s560
          %s562 = sand.u32 %s140, 1
          %s563 = smul.addr %s562, 2
          %s564 = scalar_lea.vmem [#allocation3], %s563
          %566 = dma.done %s561, 32
        $region52: #{tpu_custom_call.1} parent=47 // pred_fallthru
          _
      $region48: #{tpu_custom_call.1} parent=5 // pred_fallthru
        _
    $region6: #{tpu_custom_call.1} parent=1 // loop_footer
      %s20 = sadd.s32 1, %s16
    $region7: #{tpu_custom_call.1} parent=1 // loop_footer_branch
      %15 = sbr.rel target = $region3
    $region8: #{tpu_custom_call.1} parent=1 // loop_exit
      _
    %567 = vsyncpa [#allocation4], 1
    %s568 = scalar_lea.sflag [#allocation4], 1
    %569 = vsyncpa %s568, 1

</llo_original>
